<compile_context>
chip_gen: v7x
topology: tpu7x:2x2x1
jax: 0.10.0
libtpu: 0.0.40
codegen_flags: <defaults>
</compile_context>

<pallas_src>
import functools
import math

import jax
import jax.numpy as jnp
from jax.experimental import pallas as pl
from jax.experimental.pallas import tpu as pltpu


_TARGET_TILE_BYTES = 1 << 20  # ~1 MiB per input buffer per grid step.


# ----------------------------- kernels ------------------------------------- #

def _sum_list_kernel(*refs, acc_dtype):
    """refs = (x_0, ..., x_{K-1}, o); each a dense (TR, LANE) VMEM tile."""
    o_ref = refs[-1]
    x_refs = refs[:-1]
    acc = x_refs[0][...].astype(acc_dtype)
    for r in x_refs[1:]:
        acc = acc + r[...].astype(acc_dtype)
    o_ref[...] = acc.astype(o_ref.dtype)


def _sum_stacked_kernel(x_ref, o_ref, *, acc_dtype):
    """x_ref: (1, K, TR, LANE) dense tile; o_ref: (1, TR, LANE).

    K sits on a leading (un-tiled) axis, so the reduction is K plain dense
    vreg adds on the VPU.
    """
    x = x_ref[...].astype(acc_dtype)
    o_ref[...] = jnp.sum(x, axis=1).astype(o_ref.dtype)


# --------------------------- tiling helpers --------------------------------- #

def _choose_lane(total):
    """Largest lane width (multiple of 128) that divides `total`, else None."""
    for lane in (1024, 512, 256, 128):
        if total % lane == 0:
            return lane
    return None


def _choose_row_tile(rows, lane, itemsize, target_bytes):
    """Row tile TR: multiple of 8 (or the full dim), TR*lane*itemsize <=
    target_bytes, preferring an exact divisor of `rows` (no ragged tail)."""
    max_tr = max(target_bytes // (lane * itemsize), 1)
    if rows <= max_tr:
        return rows                       # full dim -> always a legal block
    max_tr = max((max_tr // 8) * 8, 8)
    tr = max_tr
    while tr >= 8:
        if rows % tr == 0:
            return tr
        tr -= 8
    return max_tr                         # ragged last tile (masked, rare)


# ------------------------------ wrappers ------------------------------------ #

def _merge_list(feats, target_tile_bytes):
    n = feats[0].shape[0]
    feat_shape = feats[0].shape[1:]
    out_shape = (n,) + feat_shape
    total = math.prod(out_shape)
    out_dtype = jnp.result_type(*[f.dtype for f in feats])
    acc_dtype = (jnp.float32 if jnp.issubdtype(out_dtype, jnp.floating)
                 else out_dtype)

    lane = _choose_lane(total)
    pad = 0
    flat = [f.reshape(-1) for f in feats]            # free row-major reshapes
    if lane is None:
        # Rare fallback for odd sizes: zero-pad (costs one extra copy).
        lane = 128
        pad = (-total) % (8 * lane)
        zeros = jnp.zeros((pad,), out_dtype)
        flat = [jnp.concatenate([f.astype(out_dtype), zeros]) for f in flat]
    padded = total + pad
    rows = padded // lane
    x2 = [f.reshape(rows, lane) for f in flat]

    itemsize = max(jnp.dtype(f.dtype).itemsize for f in feats)
    tr = _choose_row_tile(rows, lane, itemsize, target_tile_bytes)
    grid = (pl.cdiv(rows, tr),)

    out = pl.pallas_call(
        functools.partial(_sum_list_kernel, acc_dtype=acc_dtype),
        out_shape=jax.ShapeDtypeStruct((rows, lane), out_dtype),
        grid=grid,
        in_specs=[pl.BlockSpec((tr, lane), lambda g: (g, 0))
                  for _ in range(len(feats))],
        out_specs=pl.BlockSpec((tr, lane), lambda g: (g, 0)),
        compiler_params=pltpu.CompilerParams(
            dimension_semantics=("parallel",)),
    )(*x2)

    out = out.reshape(-1)
    if pad:
        out = out[:total]
    return out.reshape(out_shape)


def _merge_stacked(x, target_tile_bytes):
    n, k = x.shape[0], x.shape[1]
    feat_shape = x.shape[2:]
    m = math.prod(feat_shape) if feat_shape else 1
    out_dtype = x.dtype
    acc_dtype = (jnp.float32 if jnp.issubdtype(out_dtype, jnp.floating)
                 else out_dtype)

    x3 = x.reshape(n, k, m)                          # free row-major reshape
    lane = _choose_lane(m)
    pad = 0
    if lane is None:
        if m <= 1024:
            lane = m                                 # full last dim (legal)
        else:
            lane = 128
            pad = (-m) % lane
            x3 = jnp.pad(x3, ((0, 0), (0, 0), (0, pad)))  # rare fallback copy
    m_p = m + pad
    rows_f = m_p // lane
    x4 = x3.reshape(n, k, rows_f, lane)

    itemsize = jnp.dtype(x.dtype).itemsize
    # The input block carries k row-slabs; budget ~target_tile_bytes total.
    tr = _choose_row_tile(rows_f, lane, itemsize,
                          max(target_tile_bytes // max(k, 1),
                              8 * lane * itemsize))
    row_tiles = pl.cdiv(rows_f, tr)
    grid = (n * row_tiles,)                          # batch folded into grid

    out = pl.pallas_call(
        functools.partial(_sum_stacked_kernel, acc_dtype=acc_dtype),
        out_shape=jax.ShapeDtypeStruct((n, rows_f, lane), out_dtype),
        grid=grid,
        in_specs=[pl.BlockSpec(
            (1, k, tr, lane),
            lambda g, rt=row_tiles: (g // rt, 0, g % rt, 0))],
        out_specs=pl.BlockSpec(
            (1, tr, lane),
            lambda g, rt=row_tiles: (g // rt, g % rt, 0)),
        compiler_params=pltpu.CompilerParams(
            dimension_semantics=("parallel",)),
    )(x4)

    out = out.reshape(n, rows_f * lane)
    if pad:
        out = out[:, :m]
    return out.reshape((n,) + feat_shape)


def merge(features, *, target_tile_bytes=_TARGET_TILE_BYTES):
    """glasses' Merge(policy='sum').forward.

    `features` is either a list/tuple of same-shape arrays (summed
    elementwise, without materializing the stacked tensor) or a single
    (N, K, ...) array (summed over axis 1).
    """
    if isinstance(features, (list, tuple)):
        return _merge_list(list(features), target_tile_bytes)
    return _merge_stacked(features, target_tile_bytes)


# -------------------------------- demo -------------------------------------- #

if __name__ == "__main__":
    # Small shapes: batch=2, channels=4, spatial=16x16, K=4 feature maps.
    N, C, H, W = 2, 4, 16, 16
    K = 4

    key = jax.random.PRNGKey(0)
    keys = jax.random.split(key, K)
    features = [jax.random.normal(k, (N, C, H, W), jnp.float32) for k in keys]

    ref = functools.reduce(lambda a, b: a + b, features)

    # List-of-features path (the usual FPN Merge call).
    out = jax.block_until_ready(merge(features))
    assert out.shape == (N, C, H, W), out.shape
    if not jnp.allclose(out, ref, atol=1e-5, rtol=1e-5):
        raise AssertionError(
            f"list-path mismatch vs reference, max err "
            f"{float(jnp.max(jnp.abs(out - ref)))}")

    # Already-stacked tensor path (forward also accepts an (N, K, ...) tensor).
    stacked = jnp.stack(features, axis=1)
    out2 = jax.block_until_ready(merge(stacked))
    assert out2.shape == (N, C, H, W), out2.shape
    if not jnp.allclose(out2, ref, atol=1e-5, rtol=1e-5):
        raise AssertionError(
            f"stacked-path mismatch vs reference, max err "
            f"{float(jnp.max(jnp.abs(out2 - ref)))}")

    print("KERNEL_OK")
</pallas_src>

<mosaic_0001>
module attributes {stable_mosaic.version = 11 : i64} {
  func.func @_sum_list_kernel(%arg0: i32, %arg1: memref<2x1024xf32, #tpu.memory_space<vmem>>, %arg2: memref<2x1024xf32, #tpu.memory_space<vmem>>, %arg3: memref<2x1024xf32, #tpu.memory_space<vmem>>, %arg4: memref<2x1024xf32, #tpu.memory_space<vmem>>, %arg5: memref<2x1024xf32, #tpu.memory_space<vmem>>) attributes {dimension_semantics = [#tpu.dimension_semantics<parallel>], iteration_bounds = array<i64: 1>, scalar_prefetch = 0 : i64, scratch_operands = 0 : i64, tpu.core_type = #tpu.core_type<tc>, window_params = [{transform_indices = @transform_0, window_bounds = array<i64: 2, 1024>}, {transform_indices = @transform_1, window_bounds = array<i64: 2, 1024>}, {transform_indices = @transform_2, window_bounds = array<i64: 2, 1024>}, {transform_indices = @transform_3, window_bounds = array<i64: 2, 1024>}, {transform_indices = @transform_4, window_bounds = array<i64: 2, 1024>}]} {
    %c0 = arith.constant 0 : index
    %c0_0 = arith.constant 0 : index
    %0 = vector.load %arg1[%c0, %c0_0] : memref<2x1024xf32, #tpu.memory_space<vmem>>, vector<2x1024xf32>
    %c0_1 = arith.constant 0 : index
    %c0_2 = arith.constant 0 : index
    %1 = vector.load %arg2[%c0_1, %c0_2] : memref<2x1024xf32, #tpu.memory_space<vmem>>, vector<2x1024xf32>
    %2 = arith.addf %0, %1 : vector<2x1024xf32>
    %c0_3 = arith.constant 0 : index
    %c0_4 = arith.constant 0 : index
    %3 = vector.load %arg3[%c0_3, %c0_4] : memref<2x1024xf32, #tpu.memory_space<vmem>>, vector<2x1024xf32>
    %4 = arith.addf %2, %3 : vector<2x1024xf32>
    %c0_5 = arith.constant 0 : index
    %c0_6 = arith.constant 0 : index
    %5 = vector.load %arg4[%c0_5, %c0_6] : memref<2x1024xf32, #tpu.memory_space<vmem>>, vector<2x1024xf32>
    %6 = arith.addf %4, %5 : vector<2x1024xf32>
    %c0_7 = arith.constant 0 : index
    %c0_8 = arith.constant 0 : index
    %7 = vector.load %arg5[%c0_7, %c0_8] : memref<2x1024xf32, #tpu.memory_space<vmem>>, vector<2x1024xf32>
    tpu.vector_store %arg5[%c0_7, %c0_8], %6 {strides = array<i32>} : memref<2x1024xf32, #tpu.memory_space<vmem>>, vector<2x1024xf32>,
    return
  }
  func.func @transform_0(%arg0: i32) -> (i32, i32) {
    %c0_i32 = arith.constant 0 : i32
    %c0_i32_0 = arith.constant 0 : i32
    return %arg0, %c0_i32 : i32, i32
  }
  func.func @transform_1(%arg0: i32) -> (i32, i32) {
    %c0_i32 = arith.constant 0 : i32
    %c0_i32_0 = arith.constant 0 : i32
    return %arg0, %c0_i32 : i32, i32
  }
  func.func @transform_2(%arg0: i32) -> (i32, i32) {
    %c0_i32 = arith.constant 0 : i32
    %c0_i32_0 = arith.constant 0 : i32
    return %arg0, %c0_i32 : i32, i32
  }
  func.func @transform_3(%arg0: i32) -> (i32, i32) {
    %c0_i32 = arith.constant 0 : i32
    %c0_i32_0 = arith.constant 0 : i32
    return %arg0, %c0_i32 : i32, i32
  }
  func.func @transform_4(%arg0: i32) -> (i32, i32) {
    %c0_i32 = arith.constant 0 : i32
    %c0_i32_0 = arith.constant 0 : i32
    return %arg0, %c0_i32 : i32, i32
  }
}

</mosaic_0001>

<llo_original>
// kernel: tpu_custom_call.1
$region0: #{tpu_custom_call.1}
  #allocation0 [shape = 'u32[]', space=smem, size = 0x4, offset = 0x4, fixed_abs, tag = 'smem constant byte address 0x4 - core index']
  #allocation1 [shape = 'u32[144,128]{1,0:T(1,128)}', space=vmem, size = 0x12000, scoped, tag = 'internal scratch']
  %s0 = inlined_call_operand.hbm [shape: f32[2,1024], index: 0, kind: input, shape index: {}]
  %s1 = inlined_call_operand.hbm [shape: f32[2,1024], index: 1, kind: input, shape index: {}]
  %s2 = inlined_call_operand.hbm [shape: f32[2,1024], index: 2, kind: input, shape index: {}]
  %s3 = inlined_call_operand.hbm [shape: f32[2,1024], index: 3, kind: input, shape index: {}]
  %s4 = inlined_call_operand.hbm [shape: f32[2,1024], index: 4, kind: output, shape index: {}]
  %s5 = sld [smem:[#allocation0]]
  $region42: #{tpu_custom_call.1} parent=0
    _
  %s7 = ssub.s32 1, %s5
  %s8 = scalar_select 0, %s7, %s5
  $region1: #{tpu_custom_call.1} parent=0
    #allocation2 [shape = 'u8[8192]{0}', space=vmem, size = 0x2000, scoped, tag = 'input window, operand 0, single buffered']
    #allocation3 [shape = 's32[1]{0}', space=sflag, size = 0x4, scoped, tag = 'scoped memory for tpu_custom_call.1']
    #allocation4 [shape = 's32[1]{0}', space=sflag, size = 0x4, scoped, tag = 'scoped memory for tpu_custom_call.1']
    #allocation5 [shape = 'u8[8192]{0}', space=vmem, size = 0x2000, scoped, tag = 'input window, operand 1, single buffered']
    #allocation6 [shape = 's32[1]{0}', space=sflag, size = 0x4, scoped, tag = 'scoped memory for tpu_custom_call.1']
    #allocation7 [shape = 'u8[8192]{0}', space=vmem, size = 0x2000, scoped, tag = 'input window, operand 2, single buffered']
    #allocation8 [shape = 'u8[8192]{0}', space=vmem, size = 0x2000, scoped, tag = 'input window, operand 3, single buffered']
    #allocation9 [shape = 's32[1]{0}', space=sflag, size = 0x4, scoped, tag = 'scoped memory for tpu_custom_call.1']
    #allocation10 [shape = 'u8[8192]{0}', space=vmem, size = 0x2000, scoped, tag = 'output window, operand 0, single buffered']
    %9 = vsyncpa [#allocation3], 0
    %10 = vsyncpa [#allocation6], 0
    %11 = vsyncpa [#allocation9], 0
    %12 = vsyncpa [#allocation4], 0
    // Predicated region
    $region2: #{tpu_custom_call.1} parent=1 // pred_check
      _
    $region3: #{tpu_custom_call.1} parent=1 // pred_check_branch
      %14 = sbr.rel (0) target = $region5
    $region4: #{tpu_custom_call.1} parent=1 // pred_region
      %s16 = ssub.s32 256, 256
      %17 = vsyncadd [#allocation3], %s16
      %s19 = sshll.u32 [#allocation2], 4
      %s20 = int_to_ptr.vmem [resolvable:$true] %s19
      %22 = dma.hbm_to_vmem [thread:$0]  %s0, 256, %s20, [#allocation3]
    $region5: #{tpu_custom_call.1} parent=1 // pred_fallthru
      _
    // Predicated region
    $region6: #{tpu_custom_call.1} parent=1 // pred_check
      _
    $region7: #{tpu_custom_call.1} parent=1 // pred_check_branch
      %24 = sbr.rel (0) target = $region9
    $region8: #{tpu_custom_call.1} parent=1 // pred_region
      %s26 = ssub.s32 256, 256
      %27 = vsyncadd [#allocation6], %s26
      %s29 = sshll.u32 [#allocation5], 4
      %s30 = int_to_ptr.vmem [resolvable:$true] %s29
      %32 = dma.hbm_to_vmem [thread:$0]  %s1, 256, %s30, [#allocation6]
    $region9: #{tpu_custom_call.1} parent=1 // pred_fallthru
      _
    // Predicated region
    $region10: #{tpu_custom_call.1} parent=1 // pred_check
      _
    $region11: #{tpu_custom_call.1} parent=1 // pred_check_branch
      %34 = sbr.rel (0) target = $region13
    $region12: #{tpu_custom_call.1} parent=1 // pred_region
      %s36 = ssub.s32 256, 256
      %37 = vsyncadd [#allocation6], %s36
      %s39 = sshll.u32 [#allocation7], 4
      %s40 = int_to_ptr.vmem [resolvable:$true] %s39
      %42 = dma.hbm_to_vmem [thread:$0]  %s2, 256, %s40, [#allocation6]
    $region13: #{tpu_custom_call.1} parent=1 // pred_fallthru
      _
    // Predicated region
    $region14: #{tpu_custom_call.1} parent=1 // pred_check
      _
    $region15: #{tpu_custom_call.1} parent=1 // pred_check_branch
      %44 = sbr.rel (0) target = $region17
    $region16: #{tpu_custom_call.1} parent=1 // pred_region
      %s46 = ssub.s32 256, 256
      %47 = vsyncadd [#allocation9], %s46
      %s49 = sshll.u32 [#allocation8], 4
      %s50 = int_to_ptr.vmem [resolvable:$true] %s49
      %52 = dma.hbm_to_vmem [thread:$0]  %s3, 256, %s50, [#allocation9]
    $region17: #{tpu_custom_call.1} parent=1 // pred_fallthru
      _
    // Predicated region
    $region18: #{tpu_custom_call.1} parent=1 // pred_check
      _
    $region19: #{tpu_custom_call.1} parent=1 // pred_check_branch
      %54 = sbr.rel (0) target = $region21
    $region20: #{tpu_custom_call.1} parent=1 // pred_region
      %55 = dma.done [#allocation3], 256
    $region21: #{tpu_custom_call.1} parent=1 // pred_fallthru
      _
    // Predicated region
    $region22: #{tpu_custom_call.1} parent=1 // pred_check
      _
    $region23: #{tpu_custom_call.1} parent=1 // pred_check_branch
      %57 = sbr.rel (0) target = $region25
    $region24: #{tpu_custom_call.1} parent=1 // pred_region
      %58 = dma.done [#allocation6], 256
    $region25: #{tpu_custom_call.1} parent=1 // pred_fallthru
      _
    // Predicated region
    $region26: #{tpu_custom_call.1} parent=1 // pred_check
      _
    $region27: #{tpu_custom_call.1} parent=1 // pred_check_branch
      %60 = sbr.rel (0) target = $region29
    $region28: #{tpu_custom_call.1} parent=1 // pred_region
      %61 = dma.done [#allocation6], 256
    $region29: #{tpu_custom_call.1} parent=1 // pred_fallthru
      _
    // Predicated region
    $region30: #{tpu_custom_call.1} parent=1 // pred_check
      _
    $region31: #{tpu_custom_call.1} parent=1 // pred_check_branch
      %63 = sbr.rel (0) target = $region33
    $region32: #{tpu_custom_call.1} parent=1 // pred_region
      %64 = dma.done [#allocation9], 256
    $region33: #{tpu_custom_call.1} parent=1 // pred_fallthru
      _
    %v65 = vld [vmem:[#allocation2] sm:$0xff]
    %v66 = vld [vmem:[#allocation2 + $0x8] sm:$0xff]
    %v67 = vld [vmem:[#allocation5] sm:$0xff]
    %v68 = vld [vmem:[#allocation5 + $0x8] sm:$0xff]
    %v69 = vadd.f32 %v65, %v67
    %v70 = vadd.f32 %v66, %v68
    %v71 = vld [vmem:[#allocation7] sm:$0xff]
    %v72 = vld [vmem:[#allocation7 + $0x8] sm:$0xff]
    %v73 = vadd.f32 %v69, %v71
    %v74 = vadd.f32 %v70, %v72
    %v75 = vld [vmem:[#allocation8] sm:$0xff]
    %v76 = vld [vmem:[#allocation8 + $0x8] sm:$0xff]
    %v77 = vadd.f32 %v73, %v75
    %v78 = vadd.f32 %v74, %v76
    %79 = vst [vmem:[#allocation10] sm:$0xff] %v77
    %80 = vst [vmem:[#allocation10 + $0x8] sm:$0xff] %v78
    // Predicated region
    $region34: #{tpu_custom_call.1} parent=1 // pred_check
      _
    $region35: #{tpu_custom_call.1} parent=1 // pred_check_branch
      %82 = sbr.rel (0) target = $region37
    $region36: #{tpu_custom_call.1} parent=1 // pred_region
      %s84 = ssub.s32 256, 256
      %85 = vsyncadd [#allocation4], %s84
      %s87 = sshll.u32 [#allocation10], 4
      %s88 = int_to_ptr.vmem [resolvable:$true] %s87
      %90 = dma.vmem_to_hbm [thread:$0]  %s88, 256, %s4, [#allocation4]
    $region37: #{tpu_custom_call.1} parent=1 // pred_fallthru
      _
    // Predicated region
    $region38: #{tpu_custom_call.1} parent=1 // pred_check
      _
    $region39: #{tpu_custom_call.1} parent=1 // pred_check_branch
      %92 = sbr.rel (0) target = $region41
    $region40: #{tpu_custom_call.1} parent=1 // pred_region
      %93 = dma.done [#allocation4], 256
    $region41: #{tpu_custom_call.1} parent=1 // pred_fallthru
      _
    %94 = vsyncpa [#allocation3], 1
    %95 = vsyncpa [#allocation6], 1
    %96 = vsyncpa [#allocation9], 1
    %97 = vsyncpa [#allocation4], 1

</llo_original>
